<compile_context>
chip_gen: v6e
topology: v6e:2x2x1
jax: 0.10.0
libtpu: 0.0.40
codegen_flags: <defaults>
</compile_context>

<pallas_src>
import math
import functools

import jax
import jax.numpy as jnp
from jax import lax
from jax.experimental import pallas as pl
from jax.experimental.pallas import tpu as pltpu


def _multi_margin_kernel(xn_ref, w_ref, label_ref, o_ref, *,
                         s, cos_m1, sin_m1, th, mm, m2, easy_margin, tn,
                         matmul_dtype):
    j = pl.program_id(0)

    w = w_ref[...]                                        # [tn, D], streamed
    w32 = w.astype(jnp.float32)

    # Per-row inverse norm of the weight tile. The squared-norm reduction is
    # consumed immediately (stays in vregs while streaming); the normalized
    # [tn, D] tile itself is never materialized in VMEM.
    inv_wn = lax.rsqrt(jnp.maximum(jnp.sum(w32 * w32, axis=-1), 1e-24))  # [tn]

    # raw = x_n @ w^T : contract the feature dim of BOTH operands so the MXU
    # consumes the [tn, D] tile directly (no transpose, no normalized copy).
    raw = lax.dot_general(
        xn_ref[...], w.astype(matmul_dtype),
        dimension_numbers=(((1,), (1,)), ((), ())),
        preferred_element_type=jnp.float32)               # [B, tn]

    # Fold F.normalize(weight, dim=1) in as a per-column scale of the result
    # (normalization is a per-row scalar on w, so this is exact).
    cosine = raw * inv_wn[None, :]

    # phi = cos(theta + m1); clamp so rounding (cos^2 > 1) never produces NaN.
    sine = jnp.sqrt(jnp.maximum(1.0 - cosine * cosine, 0.0))
    phi = cosine * cos_m1 - sine * sin_m1
    if easy_margin:
        phi = jnp.where(cosine > 0, phi, cosine)
    else:
        phi = jnp.where(cosine - th > 0, phi, cosine - mm)

    # Single select replaces the one_hot * phi + (1 - one_hot) * cosine chain.
    # Offset the label into tile-local coordinates ([B,1] subtract) instead of
    # adding j*tn to the [B,tn] iota (saves a full-tile VALU add per step).
    b, n = cosine.shape
    label_local = label_ref[...] - j * tn                 # [B, 1]
    col_ids = lax.broadcasted_iota(jnp.int32, (b, n), dimension=1)
    out = jnp.where(col_ids == label_local, phi - m2, cosine) * s
    o_ref[...] = out.astype(o_ref.dtype)


def _pick_tn(N, D, weight_itemsize, *, target_tile_bytes=4 << 20, min_steps=4):
    """Pick the class-tile width.

    Largest lane-dense (multiple-of-128) divisor of N whose [tn, D] weight tile
    is <= ~target_tile_bytes, preferring tilings that leave >= min_steps grid
    steps so both v7x TensorCores get several steps each on the "parallel"
    axis. Falls back to >= 2 steps, then to the largest divisor, then to N
    (tiny heads: single grid step, block == full array dims is still legal).
    """
    if N < 128:
        return N
    cap = max(128, (target_tile_bytes // max(D * weight_itemsize, 1)) // 128 * 128)
    cap = min(cap, N)
    best_any = None      # largest divisor <= cap (may leave a single step)
    best_two = None      # largest divisor <= cap with >= 2 steps
    for cand in range(cap, 127, -128):
        if N % cand:
            continue
        steps = N // cand
        if steps >= min_steps:
            return cand
        if steps >= 2 and best_two is None:
            best_two = cand
        if best_any is None:
            best_any = cand
    if best_two is not None:
        return best_two
    if best_any is not None:
        return best_any
    return N


def multi_margin_product(x, weight, label, *, s=32.0, m1=0.2, m2=0.35,
                         easy_margin=False, tn=None,
                         matmul_dtype=jnp.float32, weight_dtype=None):
    """ArcFace-style multi-margin product head.

    matmul_dtype / weight_dtype default to f32 so the 1e-4 reference check in
    __main__ holds; production large-N heads should pass
    weight_dtype=matmul_dtype=jnp.bfloat16 to halve the HBM weight stream and
    run the MXU at full bf16 rate (f32 accumulate is kept either way).
    """
    B, D = x.shape
    N, D2 = weight.shape
    assert D == D2

    if weight_dtype is not None and weight.dtype != weight_dtype:
        weight = weight.astype(weight_dtype)
    w_itemsize = jnp.dtype(weight.dtype).itemsize
    x_itemsize = jnp.dtype(matmul_dtype).itemsize

    if tn is None:
        tn = _pick_tn(N, D, w_itemsize)
    assert N % tn == 0

    label2d = label.reshape(B, 1).astype(jnp.int32)

    # Normalize x once here (it is resident across all class tiles) and cast to
    # the MXU input dtype so there is no per-tile cast inside the kernel.
    x32 = x.astype(jnp.float32)
    x_n = x32 * lax.rsqrt(
        jnp.maximum(jnp.sum(x32 * x32, axis=-1, keepdims=True), 1e-24))
    x_n = x_n.astype(matmul_dtype)

    kernel = functools.partial(
        _multi_margin_kernel,
        s=float(s),
        cos_m1=math.cos(m1),
        sin_m1=math.sin(m1),
        th=math.cos(math.pi - m1),
        mm=math.sin(math.pi - m1) * m1,
        m2=float(m2),
        easy_margin=easy_margin,
        tn=tn,
        matmul_dtype=matmul_dtype,
    )

    # Explicit VMEM budget (portable across generations: v5e's scoped default
    # is only 16 MiB, v7x has 64 MiB physical). Count everything double-
    # buffered to be conservative; _pick_tn keeps the weight tile ~<= 4 MiB so
    # the request stays well under every generation's physical VMEM.
    vmem_needed = (2 * tn * D * w_itemsize        # weight double-buffer
                   + 2 * B * D * x_itemsize       # resident x (counted 2x)
                   + 2 * B * max(tn, 128) * 4     # output double-buffer
                   + 2 * B * 128 * 4)             # label block (lane-padded)
    vmem_limit = int(min(max(2 * vmem_needed, 32 << 20), 48 << 20))

    cost = pl.CostEstimate(
        flops=2 * B * N * D + 8 * B * N,
        transcendentals=B * N + N,                # sqrt per logit + rsqrt per class
        bytes_accessed=N * D * w_itemsize + B * D * x_itemsize + B * N * 4 + B * 4,
    )

    return pl.pallas_call(
        kernel,
        out_shape=jax.ShapeDtypeStruct((B, N), jnp.float32),
        grid_spec=pltpu.PrefetchScalarGridSpec(
            num_scalar_prefetch=0,
            grid=(N // tn,),
            in_specs=[
                pl.BlockSpec((B, D), lambda j: (0, 0)),    # x_n (resident)
                pl.BlockSpec((tn, D), lambda j: (j, 0)),   # weight tile (streamed)
                pl.BlockSpec((B, 1), lambda j: (0, 0)),    # label (resident)
            ],
            out_specs=pl.BlockSpec((B, tn), lambda j: (0, j)),
        ),
        compiler_params=pltpu.CompilerParams(
            dimension_semantics=("parallel",),
            vmem_limit_bytes=vmem_limit),
        cost_estimate=cost,
    )(x_n, weight, label2d)


def _reference(x, weight, label, *, s=32.0, m1=0.2, m2=0.35, easy_margin=False):
    xn = x / jnp.maximum(jnp.linalg.norm(x, axis=1, keepdims=True), 1e-12)
    wn = weight / jnp.maximum(jnp.linalg.norm(weight, axis=1, keepdims=True), 1e-12)
    cosine = xn @ wn.T
    sine = jnp.sqrt(jnp.maximum(1.0 - cosine ** 2, 0.0))
    phi = cosine * math.cos(m1) - sine * math.sin(m1)
    th = math.cos(math.pi - m1)
    mm = math.sin(math.pi - m1) * m1
    if easy_margin:
        phi = jnp.where(cosine > 0, phi, cosine)
    else:
        phi = jnp.where(cosine - th > 0, phi, cosine - mm)
    one_hot = jax.nn.one_hot(label, cosine.shape[1], dtype=cosine.dtype)
    out = one_hot * phi + (1.0 - one_hot) * cosine
    out = out - one_hot * m2
    return out * s


if __name__ == "__main__":
    # Small shapes consistent with the head: in_feature=128, out_feature=1024,
    # batch=8 (N=1024 gives 4 class-tile grid steps with the new _pick_tn, so
    # the tile-local label offset path is exercised).
    B, D, N = 8, 128, 1024
    key = jax.random.PRNGKey(0)
    kx, kw, kl = jax.random.split(key, 3)

    x = jax.random.normal(kx, (B, D), dtype=jnp.float32)

    # Deterministic xavier_uniform_ init for weight [out_feature, in_feature].
    limit = math.sqrt(6.0 / (D + N))
    weight = jax.random.uniform(kw, (N, D), dtype=jnp.float32,
                                minval=-limit, maxval=limit)

    label = jax.random.randint(kl, (B,), 0, N, dtype=jnp.int32)

    out = multi_margin_product(x, weight, label)
    out = jax.block_until_ready(out)

    ref = _reference(x, weight, label)
    assert out.shape == (B, N)
    assert jnp.allclose(out, ref, atol=1e-4, rtol=1e-4)

    print("KERNEL_OK")
</pallas_src>

<mosaic_0001>
module attributes {stable_mosaic.version = 11 : i64} {
  func.func @_multi_margin_kernel(%arg0: i32, %arg1: memref<8x128xf32, #tpu.memory_space<vmem>>, %arg2: memref<256x128xf32, #tpu.memory_space<vmem>>, %arg3: memref<8x1xi32, #tpu.memory_space<vmem>>, %arg4: memref<8x256xf32, #tpu.memory_space<vmem>>) attributes {dimension_semantics = [#tpu.dimension_semantics<parallel>], iteration_bounds = array<i64: 4>, scalar_prefetch = 0 : i64, scratch_operands = 0 : i64, tpu.core_type = #tpu.core_type<tc>, window_params = [{pipeline_mode = #tpu.pipeline_mode<synchronous>, transform_indices = @transform_0, window_bounds = array<i64: 8, 128>}, {transform_indices = @transform_1, window_bounds = array<i64: 256, 128>}, {pipeline_mode = #tpu.pipeline_mode<synchronous>, transform_indices = @transform_2, window_bounds = array<i64: 8, 1>}, {transform_indices = @transform_3, window_bounds = array<i64: 8, 256>}]} {
    %c0 = arith.constant 0 : index
    %c0_0 = arith.constant 0 : index
    %0 = vector.load %arg2[%c0, %c0_0] : memref<256x128xf32, #tpu.memory_space<vmem>>, vector<256x128xf32>
    %1 = arith.mulf %0, %0 : vector<256x128xf32>
    %cst = arith.constant dense<0.000000e+00> : vector<256xf32>
    %2 = vector.multi_reduction <add>, %1, %cst [1] : vector<256x128xf32> to vector<256xf32>
    %cst_1 = arith.constant 1.000000e-24 : f32
    %3 = vector.broadcast %cst_1 : f32 to vector<256xf32>
    %4 = arith.maximumf %2, %3 : vector<256xf32>
    %5 = math.rsqrt %4 : vector<256xf32>
    %c0_2 = arith.constant 0 : index
    %c0_3 = arith.constant 0 : index
    %6 = vector.load %arg1[%c0_2, %c0_3] : memref<8x128xf32, #tpu.memory_space<vmem>>, vector<8x128xf32>
    %cst_4 = arith.constant dense<0.000000e+00> : vector<8x256xf32>
    %7 = tpu.matmul %6, %0, %cst_4 {dimension_numbers = #tpu.dot_dimension_numbers<[1], [1], [0], [0], [0, 0, 1, 0], [], []>} : vector<8x128xf32>, vector<256x128xf32>, vector<8x256xf32> -> vector<8x256xf32>
    %8 = vector.shape_cast %5 : vector<256xf32> to vector<1x256xf32>
    %9 = vector.broadcast %8 : vector<1x256xf32> to vector<8x256xf32>
    %10 = arith.mulf %7, %9 : vector<8x256xf32>
    %11 = arith.mulf %10, %10 : vector<8x256xf32>
    %cst_5 = arith.constant 1.000000e+00 : f32
    %12 = vector.broadcast %cst_5 : f32 to vector<8x256xf32>
    %13 = arith.subf %12, %11 : vector<8x256xf32>
    %cst_6 = arith.constant 0.000000e+00 : f32
    %14 = vector.broadcast %cst_6 : f32 to vector<8x256xf32>
    %15 = arith.maximumf %13, %14 : vector<8x256xf32>
    %16 = math.sqrt %15 : vector<8x256xf32>
    %cst_7 = arith.constant 0.980066597 : f32
    %17 = vector.broadcast %cst_7 : f32 to vector<8x256xf32>
    %18 = arith.mulf %10, %17 : vector<8x256xf32>
    %cst_8 = arith.constant 0.198669329 : f32
    %19 = vector.broadcast %cst_8 : f32 to vector<8x256xf32>
    %20 = arith.mulf %16, %19 : vector<8x256xf32>
    %21 = arith.subf %18, %20 : vector<8x256xf32>
    %cst_9 = arith.constant -0.980066597 : f32
    %22 = vector.broadcast %cst_9 : f32 to vector<8x256xf32>
    %23 = arith.subf %10, %22 : vector<8x256xf32>
    %cst_10 = arith.constant 0.000000e+00 : f32
    %24 = vector.broadcast %cst_10 : f32 to vector<8x256xf32>
    %25 = arith.cmpf ogt, %23, %24 : vector<8x256xf32>
    %cst_11 = arith.constant 0.0397338644 : f32
    %26 = vector.broadcast %cst_11 : f32 to vector<8x256xf32>
    %27 = arith.subf %10, %26 : vector<8x256xf32>
    %28 = arith.select %25, %21, %27 : vector<8x256xi1>, vector<8x256xf32>
    %c0_12 = arith.constant 0 : index
    %c0_13 = arith.constant 0 : index
    %29 = vector.load %arg3[%c0_12, %c0_13] : memref<8x1xi32, #tpu.memory_space<vmem>>, vector<8x1xi32>
    %c256_i32 = arith.constant 256 : i32
    %30 = arith.muli %arg0, %c256_i32 : i32
    %31 = vector.broadcast %30 : i32 to vector<8x1xi32>
    %32 = arith.subi %29, %31 : vector<8x1xi32>
    %33 = tpu.iota {dimensions = array<i32: 1>} : vector<8x256xi32>
    %34 = vector.broadcast %32 : vector<8x1xi32> to vector<8x256xi32>
    %35 = arith.cmpi eq, %33, %34 : vector<8x256xi32>
    %cst_14 = arith.constant 3.500000e-01 : f32
    %36 = vector.broadcast %cst_14 : f32 to vector<8x256xf32>
    %37 = arith.subf %28, %36 : vector<8x256xf32>
    %38 = arith.select %35, %37, %10 : vector<8x256xi1>, vector<8x256xf32>
    %cst_15 = arith.constant 3.200000e+01 : f32
    %39 = vector.broadcast %cst_15 : f32 to vector<8x256xf32>
    %40 = arith.mulf %38, %39 : vector<8x256xf32>
    %c0_16 = arith.constant 0 : index
    %c0_17 = arith.constant 0 : index
    %41 = vector.load %arg4[%c0_16, %c0_17] : memref<8x256xf32, #tpu.memory_space<vmem>>, vector<8x256xf32>
    tpu.vector_store %arg4[%c0_16, %c0_17], %40 {strides = array<i32>} : memref<8x256xf32, #tpu.memory_space<vmem>>, vector<8x256xf32>,
    return
  }
  func.func @transform_0(%arg0: i32) -> (i32, i32) {
    %c0_i32 = arith.constant 0 : i32
    %c0_i32_0 = arith.constant 0 : i32
    %c0_i32_1 = arith.constant 0 : i32
    return %c0_i32, %c0_i32_0 : i32, i32
  }
  func.func @transform_1(%arg0: i32) -> (i32, i32) {
    %c0_i32 = arith.constant 0 : i32
    %c0_i32_0 = arith.constant 0 : i32
    return %arg0, %c0_i32 : i32, i32
  }
  func.func @transform_2(%arg0: i32) -> (i32, i32) {
    %c0_i32 = arith.constant 0 : i32
    %c0_i32_0 = arith.constant 0 : i32
    %c0_i32_1 = arith.constant 0 : i32
    return %c0_i32, %c0_i32_0 : i32, i32
  }
  func.func @transform_3(%arg0: i32) -> (i32, i32) {
    %c0_i32 = arith.constant 0 : i32
    %c0_i32_0 = arith.constant 0 : i32
    return %c0_i32, %arg0 : i32, i32
  }
}

</mosaic_0001>

<llo_original>
// kernel: tpu_custom_call.1
$region0: #{tpu_custom_call.1}
  #allocation0 [shape = 'u32[]', space=smem, size = 0x4, offset = 0x4, fixed_abs, tag = 'smem constant byte address 0x4 - core index']
  #allocation1 [shape = 'u32[144,128]{1,0:T(1,128)}', space=vmem, size = 0x12000, scoped, tag = 'internal scratch']
  %s0 = inlined_call_operand.vmem [shape: f32[8,128], index: 0, kind: input, shape index: {}]
  %s1 = inlined_call_operand.hbm [shape: f32[1024,128], index: 1, kind: input, shape index: {}]
  %s2 = inlined_call_operand.vmem [shape: s32[8,1], index: 2, kind: input, shape index: {}]
  %s3 = inlined_call_operand.hbm [shape: f32[8,1024], index: 3, kind: output, shape index: {}]
  %s4 = sld [smem:[#allocation0]]
  $region49: #{tpu_custom_call.1} parent=0
    _
  %s6 = ssub.s32 1, %s4
  %s7 = scalar_select 0, %s6, %s4
  $region1: #{tpu_custom_call.1} parent=0
    #allocation2 [shape = 'u8[262144]{0}', space=vmem, size = 0x40000, scoped, tag = 'input window, operand 1']
    #allocation3 [shape = 's32[2]{0}', space=sflag, size = 0x8, scoped, tag = 'scoped memory for tpu_custom_call.1']
    #allocation4 [shape = 's32[2]{0}', space=sflag, size = 0x8, scoped, tag = 'scoped memory for tpu_custom_call.1']
    #allocation5 [shape = 'u8[16384]{0}', space=vmem, size = 0x4000, scoped, tag = 'output window, operand 0']
    %8 = vsyncpa [#allocation3], 0
    %s9 = scalar_lea.sflag [#allocation3], 1
    %10 = vsyncpa %s9, 0
    %11 = vsyncpa [#allocation4], 0
    %s12 = scalar_lea.sflag [#allocation4], 1
    %13 = vsyncpa %s12, 0
    loop: start=0, step=1, limit=6
    $region2: #{tpu_custom_call.1} parent=1 // loop_pre_header
      _
    $region3: #{tpu_custom_call.1} parent=1 // loop_header
      %s15 = sphi 0, %s19
      %p16 = scmp.ge.s32.totalorder %s15, 6
      %s23 = sphi 0, %s23
      %s25 = sphi 0, %s23
      %s26 = sphi 0, %s25
      %s40 = sphi 0, %s26
      %s46 = sphi 0, %s48
      %s49 = sphi 0, %s46
      %s50 = sphi 0, %s49
      %s66 = sphi 0, %s50
      %s70 = sphi 0, %s70
      %s72 = sphi 0, %s70
      %s73 = sphi 0, %s72
      %s87 = sphi 0, %s73
      %s93 = sphi 0, %s95
      %s96 = sphi 0, %s93
      %s97 = sphi 0, %s96
      %s113 = sphi 0, %s97
    $region4: #{tpu_custom_call.1} parent=1 // loop_header_branch
      %18 = sbr.rel (%p16) target = $region8
    $region5: #{tpu_custom_call.1} parent=1 // loop_body
      %s20 = ssub.s32 %s15, 1
      %s21 = ssub.s32 %s15, 2
      %s22 = sadd.s32 %s15, 1
      %s24 = sadd.s32 %s23, 1
      %p27 = scmp.eq.s32.totalorder %s15, 3
      %p28 = scmp.ne.s32.totalorder %s23, %s25
      %p29 = scmp.eq.s32.totalorder %s15, 0
      %p30 = por %p28, %p29
      %p31 = scmp.ne.s32.totalorder %s23, %s25
      %p32 = scmp.eq.s32.totalorder %s20, 3
      %p33 = por %p31, %p32
      %p34 = scmp.ne.s32.totalorder %s25, %s26
      %p35 = scmp.eq.s32.totalorder %s20, 0
      %p36 = por %p34, %p35
      %p37 = scmp.ne.s32.totalorder %s25, %s26
      %p38 = scmp.eq.s32.totalorder %s21, 3
      %p39 = por %p37, %p38
      %p41 = scmp.ne.s32.totalorder %s26, %s40
      %p42 = scmp.eq.s32.totalorder %s21, 0
      %p43 = por %p41, %p42
      %s44 = ssub.s32 %s15, %s22
      %p45 = scmp.eq.s32.totalorder %s44, 0
      %s47 = sadd.s32 %s46, 1
      %s48 = scalar_select %p45, %s46, %s47
      %p51 = pneg %p45
      %p52 = scmp.eq.s32.totalorder %s15, 3
      %p53 = por %p51, %p52
      %p54 = scmp.ne.s32.totalorder %s46, %s49
      %p55 = scmp.eq.s32.totalorder %s15, 0
      %p56 = por %p54, %p55
      %p57 = scmp.ne.s32.totalorder %s46, %s49
      %p58 = scmp.eq.s32.totalorder %s20, 3
      %p59 = por %p57, %p58
      %p60 = scmp.ne.s32.totalorder %s49, %s50
      %p61 = scmp.eq.s32.totalorder %s20, 0
      %p62 = por %p60, %p61
      %p63 = scmp.ne.s32.totalorder %s49, %s50
      %p64 = scmp.eq.s32.totalorder %s21, 3
      %p65 = por %p63, %p64
      %p67 = scmp.ne.s32.totalorder %s50, %s66
      %p68 = scmp.eq.s32.totalorder %s21, 0
      %p69 = por %p67, %p68
      %s71 = sadd.s32 %s70, 1
      %p74 = scmp.eq.s32.totalorder %s15, 3
      %p75 = scmp.ne.s32.totalorder %s70, %s72
      %p76 = scmp.eq.s32.totalorder %s15, 0
      %p77 = por %p75, %p76
      %p78 = scmp.ne.s32.totalorder %s70, %s72
      %p79 = scmp.eq.s32.totalorder %s20, 3
      %p80 = por %p78, %p79
      %p81 = scmp.ne.s32.totalorder %s72, %s73
      %p82 = scmp.eq.s32.totalorder %s20, 0
      %p83 = por %p81, %p82
      %p84 = scmp.ne.s32.totalorder %s72, %s73
      %p85 = scmp.eq.s32.totalorder %s21, 3
      %p86 = por %p84, %p85
      %p88 = scmp.ne.s32.totalorder %s73, %s87
      %p89 = scmp.eq.s32.totalorder %s21, 0
      %p90 = por %p88, %p89
      %s91 = ssub.s32 %s15, %s22
      %p92 = scmp.eq.s32.totalorder %s91, 0
      %s94 = sadd.s32 %s93, 1
      %s95 = scalar_select %p92, %s93, %s94
      %p98 = pneg %p92
      %p99 = scmp.eq.s32.totalorder %s15, 3
      %p100 = por %p98, %p99
      %p101 = scmp.ne.s32.totalorder %s93, %s96
      %p102 = scmp.eq.s32.totalorder %s15, 0
      %p103 = por %p101, %p102
      %p104 = scmp.ne.s32.totalorder %s93, %s96
      %p105 = scmp.eq.s32.totalorder %s20, 3
      %p106 = por %p104, %p105
      %p107 = scmp.ne.s32.totalorder %s96, %s97
      %p108 = scmp.eq.s32.totalorder %s20, 0
      %p109 = por %p107, %p108
      %p110 = scmp.ne.s32.totalorder %s96, %s97
      %p111 = scmp.eq.s32.totalorder %s21, 3
      %p112 = por %p110, %p111
      %p114 = scmp.ne.s32.totalorder %s97, %s113
      %p115 = scmp.eq.s32.totalorder %s21, 0
      %p116 = por %p114, %p115
      %p117 = scmp.le.s32.totalorder 1, %s15
      %p118 = scmp.lt.s32.totalorder %s15, 5
      %p119 = pnand %p117, %p118
      %p120 = pneg %p119
      // Predicated region
      $region9: #{tpu_custom_call.1} parent=5 // pred_check
        _
      $region10: #{tpu_custom_call.1} parent=5 // pred_check_branch
        %122 = sbr.rel (%p119) target = $region12
      $region11: #{tpu_custom_call.1} parent=5 // pred_region
        %s123 = ssub.s32 %s15, 1
        // Predicated region
        $region13: #{tpu_custom_call.1} parent=11 // pred_check
          %p124 = pneg %p36
        $region14: #{tpu_custom_call.1} parent=11 // pred_check_branch
          %126 = sbr.rel (%p124) target = $region16
        $region15: #{tpu_custom_call.1} parent=11 // pred_region
          _
        $region16: #{tpu_custom_call.1} parent=11 // pred_fallthru
          _
        // Predicated region
        $region17: #{tpu_custom_call.1} parent=11 // pred_check
          %p127 = pneg %p83
        $region18: #{tpu_custom_call.1} parent=11 // pred_check_branch
          %129 = sbr.rel (%p127) target = $region20
        $region19: #{tpu_custom_call.1} parent=11 // pred_region
          _
        $region20: #{tpu_custom_call.1} parent=11 // pred_fallthru
          _
      $region12: #{tpu_custom_call.1} parent=5 // pred_fallthru
        _
      %p130 = scmp.lt.s32.totalorder %s15, 4
      // Predicated region
      $region21: #{tpu_custom_call.1} parent=5 // pred_check
        %p131 = pneg %p130
      $region22: #{tpu_custom_call.1} parent=5 // pred_check_branch
        %133 = sbr.rel (%p131) target = $region24
      $region23: #{tpu_custom_call.1} parent=5 // pred_region
        // Predicated region
        $region25: #{tpu_custom_call.1} parent=23 // pred_check
          %p134 = pneg %p56
        $region26: #{tpu_custom_call.1} parent=23 // pred_check_branch
          %136 = sbr.rel (%p134) target = $region28
        $region27: #{tpu_custom_call.1} parent=23 // pred_region
          %s137 = sand.u32 %s46, 1
          %s138 = scalar_lea.sflag [#allocation3], %s137
          %s139 = sand.u32 %s46, 1
          %s140 = smul.addr %s139, 256
          %s141 = scalar_lea.vmem [#allocation2], %s140
          %s142 = smul.u32 32, %s15
          %s144 = ssub.s32 4096, 4096
          %145 = vsyncadd %s138, %s144
          %s146 = smul.addr %s142, 128
          %s147 = scalar_lea.hbm %s1, %s146
          %s148 = sshll.u32 %s141, 4
          %s149 = int_to_ptr.vmem [resolvable:$true] %s148
          %154 = dma.hbm_to_vmem [thread:$0]  %s147, 4096, %s149, %s138, 128, 128, 8
        $region28: #{tpu_custom_call.1} parent=23 // pred_fallthru
          _
      $region24: #{tpu_custom_call.1} parent=5 // pred_fallthru
        _
      %p155 = scmp.le.s32.totalorder 1, %s15
      %p156 = scmp.lt.s32.totalorder %s15, 5
      %p157 = pnand %p155, %p156
      %p158 = pneg %p157
      // Predicated region
      $region29: #{tpu_custom_call.1} parent=5 // pred_check
        _
      $region30: #{tpu_custom_call.1} parent=5 // pred_check_branch
        %160 = sbr.rel (%p157) target = $region32
      $region31: #{tpu_custom_call.1} parent=5 // pred_region
        %s161 = ssub.s32 %s15, 1
        %s162 = sand.u32 %s49, 1
        %s163 = scalar_lea.sflag [#allocation3], %s162
        %s164 = sand.u32 %s49, 1
        %s165 = smul.addr %s164, 256
        %s166 = scalar_lea.vmem [#allocation2], %s165
        // Predicated region
        $region33: #{tpu_custom_call.1} parent=31 // pred_check
          %p167 = pneg %p62
        $region34: #{tpu_custom_call.1} parent=31 // pred_check_branch
          %169 = sbr.rel (%p167) target = $region36
        $region35: #{tpu_custom_call.1} parent=31 // pred_region
          %170 = dma.done %s163, 4096
        $region36: #{tpu_custom_call.1} parent=31 // pred_fallthru
          _
        %p171 = pneg %p36
        %p172 = pneg %p33
        %s173 = sand.u32 %s49, 1
        %s174 = scalar_lea.sflag [#allocation3], %s173
        %s175 = sand.u32 %s49, 1
        %s176 = smul.addr %s175, 256
        %s177 = scalar_lea.vmem [#allocation2], %s176
        %p178 = pneg %p62
        %p179 = pneg %p59
        %p180 = pneg %p83
        %p181 = pneg %p80
        %p182 = pneg %p109
        %p183 = pneg %p106
        %s184 = sand.u32 %s96, 1
        %s185 = scalar_lea.sflag [#allocation4], %s184
        %s186 = sand.u32 %s96, 1
        %s187 = smul.addr %s186, 16
        %s188 = scalar_lea.vmem [#allocation5], %s187
        %s189 = smul.u32 32, %s20
        %s190 = smul.u32 2, %s20
        %v191 = vld [vmem:[%s166] sm:$0xff]
        %v192 = vld [vmem:[%s166 + $0x8] sm:$0xff]
        %v193 = vld [vmem:[%s166 + $0x10] sm:$0xff]
        %v194 = vld [vmem:[%s166 + $0x18] sm:$0xff]
        %v195 = vld [vmem:[%s166 + $0x20] sm:$0xff]
        %v196 = vld [vmem:[%s166 + $0x28] sm:$0xff]
        %v197 = vld [vmem:[%s166 + $0x30] sm:$0xff]
        %v198 = vld [vmem:[%s166 + $0x38] sm:$0xff]
        %v199 = vld [vmem:[%s166 + $0x40] sm:$0xff]
        %v200 = vld [vmem:[%s166 + $0x48] sm:$0xff]
        %v201 = vld [vmem:[%s166 + $0x50] sm:$0xff]
        %v202 = vld [vmem:[%s166 + $0x58] sm:$0xff]
        %v203 = vld [vmem:[%s166 + $0x60] sm:$0xff]
        %v204 = vld [vmem:[%s166 + $0x68] sm:$0xff]
        %v205 = vld [vmem:[%s166 + $0x70] sm:$0xff]
        %v206 = vld [vmem:[%s166 + $0x78] sm:$0xff]
        %v207 = vld [vmem:[%s166 + $0x80] sm:$0xff]
        %v208 = vld [vmem:[%s166 + $0x88] sm:$0xff]
        %v209 = vld [vmem:[%s166 + $0x90] sm:$0xff]
        %v210 = vld [vmem:[%s166 + $0x98] sm:$0xff]
        %v211 = vld [vmem:[%s166 + $0xa0] sm:$0xff]
        %v212 = vld [vmem:[%s166 + $0xa8] sm:$0xff]
        %v213 = vld [vmem:[%s166 + $0xb0] sm:$0xff]
        %v214 = vld [vmem:[%s166 + $0xb8] sm:$0xff]
        %v215 = vld [vmem:[%s166 + $0xc0] sm:$0xff]
        %v216 = vld [vmem:[%s166 + $0xc8] sm:$0xff]
        %v217 = vld [vmem:[%s166 + $0xd0] sm:$0xff]
        %v218 = vld [vmem:[%s166 + $0xd8] sm:$0xff]
        %v219 = vld [vmem:[%s166 + $0xe0] sm:$0xff]
        %v220 = vld [vmem:[%s166 + $0xe8] sm:$0xff]
        %v221 = vld [vmem:[%s166 + $0xf0] sm:$0xff]
        %v222 = vld [vmem:[%s166 + $0xf8] sm:$0xff]
        %v223 = vmul.f32 %v191, %v191
        %v224 = vmul.f32 %v192, %v192
        %v225 = vmul.f32 %v193, %v193
        %v226 = vmul.f32 %v194, %v194
        %v227 = vmul.f32 %v195, %v195
        %v228 = vmul.f32 %v196, %v196
        %v229 = vmul.f32 %v197, %v197
        %v230 = vmul.f32 %v198, %v198
        %v231 = vmul.f32 %v199, %v199
        %v232 = vmul.f32 %v200, %v200
        %v233 = vmul.f32 %v201, %v201
        %v234 = vmul.f32 %v202, %v202
        %v235 = vmul.f32 %v203, %v203
        %v236 = vmul.f32 %v204, %v204
        %v237 = vmul.f32 %v205, %v205
        %v238 = vmul.f32 %v206, %v206
        %v239 = vmul.f32 %v207, %v207
        %v240 = vmul.f32 %v208, %v208
        %v241 = vmul.f32 %v209, %v209
        %v242 = vmul.f32 %v210, %v210
        %v243 = vmul.f32 %v211, %v211
        %v244 = vmul.f32 %v212, %v212
        %v245 = vmul.f32 %v213, %v213
        %v246 = vmul.f32 %v214, %v214
        %v247 = vmul.f32 %v215, %v215
        %v248 = vmul.f32 %v216, %v216
        %v249 = vmul.f32 %v217, %v217
        %v250 = vmul.f32 %v218, %v218
        %v251 = vmul.f32 %v219, %v219
        %v252 = vmul.f32 %v220, %v220
        %v253 = vmul.f32 %v221, %v221
        %v254 = vmul.f32 %v222, %v222
        %255 = vadd.xlane.f32.xlu0 %v223
        %v256 = vpop.xlane.xlu0 %255
        %257 = vadd.xlane.f32.xlu0 %v224
        %v258 = vpop.xlane.xlu0 %257
        %259 = vadd.xlane.f32.xlu0 %v225
        %v260 = vpop.xlane.xlu0 %259
        %261 = vadd.xlane.f32.xlu0 %v226
        %v262 = vpop.xlane.xlu0 %261
        %263 = vadd.xlane.f32.xlu0 %v227
        %v264 = vpop.xlane.xlu0 %263
        %265 = vadd.xlane.f32.xlu0 %v228
        %v266 = vpop.xlane.xlu0 %265
        %267 = vadd.xlane.f32.xlu0 %v229
        %v268 = vpop.xlane.xlu0 %267
        %269 = vadd.xlane.f32.xlu0 %v230
        %v270 = vpop.xlane.xlu0 %269
        %271 = vadd.xlane.f32.xlu0 %v231
        %v272 = vpop.xlane.xlu0 %271
        %273 = vadd.xlane.f32.xlu0 %v232
        %v274 = vpop.xlane.xlu0 %273
        %275 = vadd.xlane.f32.xlu0 %v233
        %v276 = vpop.xlane.xlu0 %275
        %277 = vadd.xlane.f32.xlu0 %v234
        %v278 = vpop.xlane.xlu0 %277
        %279 = vadd.xlane.f32.xlu0 %v235
        %v280 = vpop.xlane.xlu0 %279
        %281 = vadd.xlane.f32.xlu0 %v236
        %v282 = vpop.xlane.xlu0 %281
        %283 = vadd.xlane.f32.xlu0 %v237
        %v284 = vpop.xlane.xlu0 %283
        %285 = vadd.xlane.f32.xlu0 %v238
        %v286 = vpop.xlane.xlu0 %285
        %287 = vadd.xlane.f32.xlu0 %v239
        %v288 = vpop.xlane.xlu0 %287
        %289 = vadd.xlane.f32.xlu0 %v240
        %v290 = vpop.xlane.xlu0 %289
        %291 = vadd.xlane.f32.xlu0 %v241
        %v292 = vpop.xlane.xlu0 %291
        %293 = vadd.xlane.f32.xlu0 %v242
        %v294 = vpop.xlane.xlu0 %293
        %295 = vadd.xlane.f32.xlu0 %v243
        %v296 = vpop.xlane.xlu0 %295
        %297 = vadd.xlane.f32.xlu0 %v244
        %v298 = vpop.xlane.xlu0 %297
        %299 = vadd.xlane.f32.xlu0 %v245
        %v300 = vpop.xlane.xlu0 %299
        %301 = vadd.xlane.f32.xlu0 %v246
        %v302 = vpop.xlane.xlu0 %301
        %303 = vadd.xlane.f32.xlu0 %v247
        %v304 = vpop.xlane.xlu0 %303
        %305 = vadd.xlane.f32.xlu0 %v248
        %v306 = vpop.xlane.xlu0 %305
        %307 = vadd.xlane.f32.xlu0 %v249
        %v308 = vpop.xlane.xlu0 %307
        %309 = vadd.xlane.f32.xlu0 %v250
        %v310 = vpop.xlane.xlu0 %309
        %311 = vadd.xlane.f32.xlu0 %v251
        %v312 = vpop.xlane.xlu0 %311
        %313 = vadd.xlane.f32.xlu0 %v252
        %v314 = vpop.xlane.xlu0 %313
        %315 = vadd.xlane.f32.xlu0 %v253
        %v316 = vpop.xlane.xlu0 %315
        %317 = vadd.xlane.f32.xlu0 %v254
        %v318 = vpop.xlane.xlu0 %317
        %v319 = vmax.f32 %v256, 1e-24
        %v320 = vmax.f32 %v258, 1e-24
        %v321 = vmax.f32 %v260, 1e-24
        %v322 = vmax.f32 %v262, 1e-24
        %v323 = vmax.f32 %v264, 1e-24
        %v324 = vmax.f32 %v266, 1e-24
        %v325 = vmax.f32 %v268, 1e-24
        %v326 = vmax.f32 %v270, 1e-24
        %v327 = vmax.f32 %v272, 1e-24
        %v328 = vmax.f32 %v274, 1e-24
        %v329 = vmax.f32 %v276, 1e-24
        %v330 = vmax.f32 %v278, 1e-24
        %v331 = vmax.f32 %v280, 1e-24
        %v332 = vmax.f32 %v282, 1e-24
        %v333 = vmax.f32 %v284, 1e-24
        %v334 = vmax.f32 %v286, 1e-24
        %v335 = vmax.f32 %v288, 1e-24
        %v336 = vmax.f32 %v290, 1e-24
        %v337 = vmax.f32 %v292, 1e-24
        %v338 = vmax.f32 %v294, 1e-24
        %v339 = vmax.f32 %v296, 1e-24
        %v340 = vmax.f32 %v298, 1e-24
        %v341 = vmax.f32 %v300, 1e-24
        %v342 = vmax.f32 %v302, 1e-24
        %v343 = vmax.f32 %v304, 1e-24
        %v344 = vmax.f32 %v306, 1e-24
        %v345 = vmax.f32 %v308, 1e-24
        %v346 = vmax.f32 %v310, 1e-24
        %v347 = vmax.f32 %v312, 1e-24
        %v348 = vmax.f32 %v314, 1e-24
        %v349 = vmax.f32 %v316, 1e-24
        %v350 = vmax.f32 %v318, 1e-24
        %v351 = vrsqrt.pop %v319
        %v352 = vrsqrt.pop %v320
        %v353 = vrsqrt.pop %v321
        %v354 = vrsqrt.pop %v322
        %v355 = vrsqrt.pop %v323
        %v356 = vrsqrt.pop %v324
        %v357 = vrsqrt.pop %v325
        %v358 = vrsqrt.pop %v326
        %v359 = vrsqrt.pop %v327
        %v360 = vrsqrt.pop %v328
        %v361 = vrsqrt.pop %v329
        %v362 = vrsqrt.pop %v330
        %v363 = vrsqrt.pop %v331
        %v364 = vrsqrt.pop %v332
        %v365 = vrsqrt.pop %v333
        %v366 = vrsqrt.pop %v334
        %v367 = vrsqrt.pop %v335
        %v368 = vrsqrt.pop %v336
        %v369 = vrsqrt.pop %v337
        %v370 = vrsqrt.pop %v338
        %v371 = vrsqrt.pop %v339
        %v372 = vrsqrt.pop %v340
        %v373 = vrsqrt.pop %v341
        %v374 = vrsqrt.pop %v342
        %v375 = vrsqrt.pop %v343
        %v376 = vrsqrt.pop %v344
        %v377 = vrsqrt.pop %v345
        %v378 = vrsqrt.pop %v346
        %v379 = vrsqrt.pop %v347
        %v380 = vrsqrt.pop %v348
        %v381 = vrsqrt.pop %v349
        %v382 = vrsqrt.pop %v350
        %v383 = vld [vmem:[%s0] sm:$0xff]
        %384 = vmatprep.subr.mxu0 0.0
        %385 = vmatpush1.xpose.msra.mxu0 %v206
        %386 = vmatprep.subr.mxu0 0.0
        %387 = vmatpush1.xpose.msra.mxu0 %v205
        %388 = vmatprep.subr.mxu0 0.0
        %389 = vmatpush1.xpose.msra.mxu0 %v204
        %390 = vmatprep.subr.mxu0 0.0
        %391 = vmatpush1.xpose.msra.mxu0 %v203
        %392 = vmatprep.subr.mxu0 0.0
        %393 = vmatpush1.xpose.msra.mxu0 %v202
        %394 = vmatprep.subr.mxu0 0.0
        %395 = vmatpush1.xpose.msra.mxu0 %v201
        %396 = vmatprep.subr.mxu0 0.0
        %397 = vmatpush1.xpose.msra.mxu0 %v200
        %398 = vmatprep.subr.mxu0 0.0
        %399 = vmatpush1.xpose.msra.mxu0 %v199
        %400 = vmatprep.subr.mxu0 0.0
        %401 = vmatpush1.xpose.msra.mxu0 %v198
        %402 = vmatprep.subr.mxu0 0.0
        %403 = vmatpush1.xpose.msra.mxu0 %v197
        %404 = vmatprep.subr.mxu0 0.0
        %405 = vmatpush1.xpose.msra.mxu0 %v196
        %406 = vmatprep.subr.mxu0 0.0
        %407 = vmatpush1.xpose.msra.mxu0 %v195
        %408 = vmatprep.subr.mxu0 0.0
        %409 = vmatpush1.xpose.msra.mxu0 %v194
        %410 = vmatprep.subr.mxu0 0.0
        %411 = vmatpush1.xpose.msra.mxu0 %v193
        %412 = vmatprep.subr.mxu0 0.0
        %413 = vmatpush1.xpose.msra.mxu0 %v192
        %414 = vmatprep.subr.mxu0 0.0
        %415 = vmatpush1.xpose.msra.mxu0 %v191
        %416 = vmatprep.subr.mxu0 0.0
        %417 = vmatpush2.xpose.msra.mxu0 %v222
        %418 = vmatprep.subr.mxu0 0.0
        %419 = vmatpush2.xpose.msra.mxu0 %v221
        %420 = vmatprep.subr.mxu0 0.0
        %421 = vmatpush2.xpose.msra.mxu0 %v220
        %422 = vmatprep.subr.mxu0 0.0
        %423 = vmatpush2.xpose.msra.mxu0 %v219
        %424 = vmatprep.subr.mxu0 0.0
        %425 = vmatpush2.xpose.msra.mxu0 %v218
        %426 = vmatprep.subr.mxu0 0.0
        %427 = vmatpush2.xpose.msra.mxu0 %v217
        %428 = vmatprep.subr.mxu0 0.0
        %429 = vmatpush2.xpose.msra.mxu0 %v216
        %430 = vmatprep.subr.mxu0 0.0
        %431 = vmatpush2.xpose.msra.mxu0 %v215
        %432 = vmatprep.subr.mxu0 0.0
        %433 = vmatpush2.xpose.msra.mxu0 %v214
        %434 = vmatprep.subr.mxu0 0.0
        %435 = vmatpush2.xpose.msra.mxu0 %v213
        %436 = vmatprep.subr.mxu0 0.0
        %437 = vmatpush2.xpose.msra.mxu0 %v212
        %438 = vmatprep.subr.mxu0 0.0
        %439 = vmatpush2.xpose.msra.mxu0 %v211
        %440 = vmatprep.subr.mxu0 0.0
        %441 = vmatpush2.xpose.msra.mxu0 %v210
        %442 = vmatprep.subr.mxu0 0.0
        %443 = vmatpush2.xpose.msra.mxu0 %v209
        %444 = vmatprep.subr.mxu0 0.0
        %445 = vmatpush2.xpose.msra.mxu0 %v208
        %446 = vmatprep.subr.mxu0 0.0
        %447 = vmatpush2.xpose.msra.mxu0 %v207
        %448 = vmatprep.mubr.f32.mxu0 0.0
        %449 = vmatmul.mubr.f32.gmra.mxu0 %v383
        %v450 = vpop.f32.mrf.mxu0
        %v451 = vadd.f32 0.0, %v450
        %v452 = vpop.f32.mrf.mxu0
        %v453 = vadd.f32 0.0, %v452
        %454 = vdwg.mxu0
        %v487 = vlaneseq
        %v488 = vand.u32 %v487, 127
        %v489 = vlaneseq
        %v490 = vshrl.u32 %v489, 7
        %v491 = vsub.s32 %v488, %v490
        %v492 = vrot.slane %v351, %v491
        %v493 = vadd.s32 %v488, 4294967288
        %v494 = vlaneseq
        %v495 = vshrl.u32 %v494, 7
        %v496 = vsub.s32 %v493, %v495
        %v497 = vrot.slane %v352, %v496
        %vm498 = vcmask 130112
        %v499 = vsel %vm498, %v497, %v492
        %v500 = vadd.s32 %v488, 4294967280
        %v501 = vlaneseq
        %v502 = vshrl.u32 %v501, 7
        %v503 = vsub.s32 %v500, %v502
        %v504 = vrot.slane %v353, %v503
        %vm505 = vcmask 195712
        %v506 = vsel %vm505, %v504, %v499
        %v507 = vadd.s32 %v488, 4294967272
        %v508 = vlaneseq
        %v509 = vshrl.u32 %v508, 7
        %v510 = vsub.s32 %v507, %v509
        %v511 = vrot.slane %v354, %v510
        %vm512 = vcmask 261312
        %v513 = vsel %vm512, %v511, %v506
        %v514 = vadd.s32 %v488, 4294967264
        %v515 = vlaneseq
        %v516 = vshrl.u32 %v515, 7
        %v517 = vsub.s32 %v514, %v516
        %v518 = vrot.slane %v355, %v517
        %vm519 = vcmask 326912
        %v520 = vsel %vm519, %v518, %v513
        %v521 = vadd.s32 %v488, 4294967256
        %v522 = vlaneseq
        %v523 = vshrl.u32 %v522, 7
        %v524 = vsub.s32 %v521, %v523
        %v525 = vrot.slane %v356, %v524
        %vm526 = vcmask 392512
        %v527 = vsel %vm526, %v525, %v520
        %v528 = vadd.s32 %v488, 4294967248
        %v529 = vlaneseq
        %v530 = vshrl.u32 %v529, 7
        %v531 = vsub.s32 %v528, %v530
        %v532 = vrot.slane %v357, %v531
        %vm533 = vcmask 458112
        %v534 = vsel %vm533, %v532, %v527
        %v535 = vadd.s32 %v488, 4294967240
        %v536 = vlaneseq
        %v537 = vshrl.u32 %v536, 7
        %v538 = vsub.s32 %v535, %v537
        %v539 = vrot.slane %v358, %v538
        %vm540 = vcmask 523712
        %v541 = vsel %vm540, %v539, %v534
        %v542 = vadd.s32 %v488, 4294967232
        %v543 = vlaneseq
        %v544 = vshrl.u32 %v543, 7
        %v545 = vsub.s32 %v542, %v544
        %v546 = vrot.slane %v359, %v545
        %vm547 = vcmask 589312
        %v548 = vsel %vm547, %v546, %v541
        %v549 = vadd.s32 %v488, 4294967224
        %v550 = vlaneseq
        %v551 = vshrl.u32 %v550, 7
        %v552 = vsub.s32 %v549, %v551
        %v553 = vrot.slane %v360, %v552
        %vm554 = vcmask 654912
        %v555 = vsel %vm554, %v553, %v548
        %v556 = vadd.s32 %v488, 4294967216
        %v557 = vlaneseq
        %v558 = vshrl.u32 %v557, 7
        %v559 = vsub.s32 %v556, %v558
        %v560 = vrot.slane %v361, %v559
        %vm561 = vcmask 720512
        %v562 = vsel %vm561, %v560, %v555
        %v563 = vadd.s32 %v488, 4294967208
        %v564 = vlaneseq
        %v565 = vshrl.u32 %v564, 7
        %v566 = vsub.s32 %v563, %v565
        %v567 = vrot.slane %v362, %v566
        %vm568 = vcmask 786112
        %v569 = vsel %vm568, %v567, %v562
        %v570 = vadd.s32 %v488, 4294967200
        %v571 = vlaneseq
        %v572 = vshrl.u32 %v571, 7
        %v573 = vsub.s32 %v570, %v572
        %v574 = vrot.slane %v363, %v573
        %vm575 = vcmask 851712
        %v576 = vsel %vm575, %v574, %v569
        %v577 = vadd.s32 %v488, 4294967192
        %v578 = vlaneseq
        %v579 = vshrl.u32 %v578, 7
        %v580 = vsub.s32 %v577, %v579
        %v581 = vrot.slane %v364, %v580
        %vm582 = vcmask 917312
        %v583 = vsel %vm582, %v581, %v576
        %v584 = vadd.s32 %v488, 4294967184
        %v585 = vlaneseq
        %v586 = vshrl.u32 %v585, 7
        %v587 = vsub.s32 %v584, %v586
        %v588 = vrot.slane %v365, %v587
        %vm589 = vcmask 982912
        %v590 = vsel %vm589, %v588, %v583
        %v591 = vadd.s32 %v488, 4294967176
        %v592 = vlaneseq
        %v593 = vshrl.u32 %v592, 7
        %v594 = vsub.s32 %v591, %v593
        %v595 = vrot.slane %v366, %v594
        %vm596 = vcmask 1048512
        %v597 = vsel %vm596, %v595, %v590
        %v598 = vlaneseq
        %v599 = vshrl.u32 %v598, 7
        %v600 = vsub.s32 %v488, %v599
        %v601 = vrot.slane %v367, %v600
        %v602 = vlaneseq
        %v603 = vshrl.u32 %v602, 7
        %v604 = vsub.s32 %v493, %v603
        %v605 = vrot.slane %v368, %v604
        %v606 = vsel %vm498, %v605, %v601
        %v607 = vlaneseq
        %v608 = vshrl.u32 %v607, 7
        %v609 = vsub.s32 %v500, %v608
        %v610 = vrot.slane %v369, %v609
        %v611 = vsel %vm505, %v610, %v606
        %v612 = vlaneseq
        %v613 = vshrl.u32 %v612, 7
        %v614 = vsub.s32 %v507, %v613
        %v615 = vrot.slane %v370, %v614
        %v616 = vsel %vm512, %v615, %v611
        %v617 = vlaneseq
        %v618 = vshrl.u32 %v617, 7
        %v619 = vsub.s32 %v514, %v618
        %v620 = vrot.slane %v371, %v619
        %v621 = vsel %vm519, %v620, %v616
        %v622 = vlaneseq
        %v623 = vshrl.u32 %v622, 7
        %v624 = vsub.s32 %v521, %v623
        %v625 = vrot.slane %v372, %v624
        %v626 = vsel %vm526, %v625, %v621
        %v627 = vlaneseq
        %v628 = vshrl.u32 %v627, 7
        %v629 = vsub.s32 %v528, %v628
        %v630 = vrot.slane %v373, %v629
        %v631 = vsel %vm533, %v630, %v626
        %v632 = vlaneseq
        %v633 = vshrl.u32 %v632, 7
        %v634 = vsub.s32 %v535, %v633
        %v635 = vrot.slane %v374, %v634
        %v636 = vsel %vm540, %v635, %v631
        %v637 = vlaneseq
        %v638 = vshrl.u32 %v637, 7
        %v639 = vsub.s32 %v542, %v638
        %v640 = vrot.slane %v375, %v639
        %v641 = vsel %vm547, %v640, %v636
        %v642 = vlaneseq
        %v643 = vshrl.u32 %v642, 7
        %v644 = vsub.s32 %v549, %v643
        %v645 = vrot.slane %v376, %v644
        %v646 = vsel %vm554, %v645, %v641
        %v647 = vlaneseq
        %v648 = vshrl.u32 %v647, 7
        %v649 = vsub.s32 %v556, %v648
        %v650 = vrot.slane %v377, %v649
        %v651 = vsel %vm561, %v650, %v646
        %v652 = vlaneseq
        %v653 = vshrl.u32 %v652, 7
        %v654 = vsub.s32 %v563, %v653
        %v655 = vrot.slane %v378, %v654
        %v656 = vsel %vm568, %v655, %v651
        %v657 = vlaneseq
        %v658 = vshrl.u32 %v657, 7
        %v659 = vsub.s32 %v570, %v658
        %v660 = vrot.slane %v379, %v659
        %v661 = vsel %vm575, %v660, %v656
        %v662 = vlaneseq
        %v663 = vshrl.u32 %v662, 7
        %v664 = vsub.s32 %v577, %v663
        %v665 = vrot.slane %v380, %v664
        %v666 = vsel %vm582, %v665, %v661
        %v667 = vlaneseq
        %v668 = vshrl.u32 %v667, 7
        %v669 = vsub.s32 %v584, %v668
        %v670 = vrot.slane %v381, %v669
        %v671 = vsel %vm589, %v670, %v666
        %v672 = vlaneseq
        %v673 = vshrl.u32 %v672, 7
        %v674 = vsub.s32 %v591, %v673
        %v675 = vrot.slane %v382, %v674
        %v676 = vsel %vm596, %v675, %v671
        %vm677 = vcmask 1042434
        %v678 = vsel %vm677, %v597, %v597
        %vm679 = vcmask 1043459
        %v680 = vsel %vm679, %v597, %v678
        %vm681 = vcmask 1044484
        %v682 = vsel %vm681, %v597, %v680
        %vm683 = vcmask 1045509
        %v684 = vsel %vm683, %v597, %v682
        %vm685 = vcmask 1046534
        %v686 = vsel %vm685, %v597, %v684
        %vm687 = vcmask 1047559
        %v688 = vsel %vm687, %v597, %v686
        %v689 = vsel %vm677, %v676, %v676
        %v690 = vsel %vm679, %v676, %v689
        %v691 = vsel %vm681, %v676, %v690
        %v692 = vsel %vm683, %v676, %v691
        %v693 = vsel %vm685, %v676, %v692
        %v694 = vsel %vm687, %v676, %v693
        %v697 = vmul.f32 %v451, %v688
        %v698 = vmul.f32 %v453, %v694
        %v699 = vmul.f32 %v697, %v697
        %v700 = vmul.f32 %v698, %v698
        %v701 = vsub.f32 1.0, %v699
        %v702 = vsub.f32 1.0, %v700
        %v703 = vmax.f32 %v701, 0.0
        %v704 = vmax.f32 %v702, 0.0
        %v705 = vrsqrt.pop %v703
        %v706 = vmul.f32 %v703, %v705
        %vm707 = vcmp.eq.f32.partialorder %v703, inf
        %v708 = vsel %vm707, %v703, %v706
        %vm709 = vcmp.eq.f32.partialorder %v703, 0.0
        %v710 = vand.u32 %v703, 2147483648
        %v711 = vsel %vm709, %v710, %v708
        %v712 = vrsqrt.pop %v704
        %v713 = vmul.f32 %v704, %v712
        %vm714 = vcmp.eq.f32.partialorder %v704, inf
        %v715 = vsel %vm714, %v704, %v713
        %vm716 = vcmp.eq.f32.partialorder %v704, 0.0
        %v717 = vand.u32 %v704, 2147483648
        %v718 = vsel %vm716, %v717, %v715
        %v719 = vmul.f32 %v697, 0.9800666
        %v720 = vmul.f32 %v698, 0.9800666
        %v721 = vmul.f32 %v711, 0.19866933
        %v722 = vmul.f32 %v718, 0.19866933
        %v723 = vsub.f32 %v719, %v721
        %v724 = vsub.f32 %v720, %v722
        %v725 = vsub.f32 %v697, -0.9800666
        %v726 = vsub.f32 %v698, -0.9800666
        %vm727 = vcmp.gt.f32.partialorder %v725, 0.0
        %vm728 = vcmp.gt.f32.partialorder %v726, 0.0
        %v729 = vsub.f32 %v697, 0.039733864
        %v730 = vsub.f32 %v698, 0.039733864
        %v731 = vsel %vm727, %v723, %v729
        %v732 = vsel %vm728, %v724, %v730
        %v733 = vld [vmem:[%s2] sm:$0xff]
        %s734 = smul.u32 %s20, 256
        %v735 = vstv %s734
        %v736 = vsub.s32 %v733, %v735
        %v737 = vadd.s32 %v488, 128
        %738 = vset.pattern.permute.xlu0 0
        %739 = vperm.xlu0 %738, %v736
        %v740 = vpop.permute.xlu0 %739
        %vm741 = vcmp.eq.s32.totalorder %v488, %v740
        %vm742 = vcmp.eq.s32.totalorder %v737, %v740
        %v743 = vsub.f32 %v731, 0.35
        %v744 = vsub.f32 %v732, 0.35
        %v745 = vsel %vm741, %v743, %v697
        %v746 = vsel %vm742, %v744, %v698
        %v747 = vmul.f32 %v745, 32.0
        %v748 = vmul.f32 %v746, 32.0
        %749 = vst [vmem:[%s188] sm:$0xff] %v747
        %750 = vst [vmem:[%s188 + $0x8] sm:$0xff] %v748
        %s751 = sand.u32 %s96, 1
        %s752 = scalar_lea.sflag [#allocation4], %s751
        %s753 = sand.u32 %s96, 1
        %s754 = smul.addr %s753, 16
        %s755 = scalar_lea.vmem [#allocation5], %s754
        // Predicated region
        $region37: #{tpu_custom_call.1} parent=31 // pred_check
          %p756 = pneg %p106
        $region38: #{tpu_custom_call.1} parent=31 // pred_check_branch
          %758 = sbr.rel (%p756) target = $region40
        $region39: #{tpu_custom_call.1} parent=31 // pred_region
          %s759 = smul.u32 2, %s20
          %s761 = ssub.s32 256, 256
          %762 = vsyncadd %s752, %s761
          %s763 = smul.addr %s759, 128
          %s764 = scalar_lea.hbm %s3, %s763
          %s766 = sshll.u32 %s755, 4
          %s767 = int_to_ptr.vmem [resolvable:$true] %s766
          %769 = dma.vmem_to_hbm [thread:$0]  %s767, 256, %s764, %s752
        $region40: #{tpu_custom_call.1} parent=31 // pred_fallthru
          _
      $region32: #{tpu_custom_call.1} parent=5 // pred_fallthru
        _
      %p770 = scmp.le.s32.totalorder 2, %s15
      // Predicated region
      $region41: #{tpu_custom_call.1} parent=5 // pred_check
        %p771 = pneg %p770
      $region42: #{tpu_custom_call.1} parent=5 // pred_check_branch
        %773 = sbr.rel (%p771) target = $region44
      $region43: #{tpu_custom_call.1} parent=5 // pred_region
        %s774 = ssub.s32 %s15, 2
        // Predicated region
        $region45: #{tpu_custom_call.1} parent=43 // pred_check
          %p775 = pneg %p112
        $region46: #{tpu_custom_call.1} parent=43 // pred_check_branch
          %777 = sbr.rel (%p775) target = $region48
        $region47: #{tpu_custom_call.1} parent=43 // pred_region
          %s778 = sand.u32 %s97, 1
          %s779 = scalar_lea.sflag [#allocation4], %s778
          %s780 = sand.u32 %s97, 1
          %s781 = smul.addr %s780, 16
          %s782 = scalar_lea.vmem [#allocation5], %s781
          %783 = dma.done %s779, 256
        $region48: #{tpu_custom_call.1} parent=43 // pred_fallthru
          _
      $region44: #{tpu_custom_call.1} parent=5 // pred_fallthru
        _
    $region6: #{tpu_custom_call.1} parent=1 // loop_footer
      %s19 = sadd.s32 1, %s15
    $region7: #{tpu_custom_call.1} parent=1 // loop_footer_branch
      %14 = sbr.rel target = $region3
    $region8: #{tpu_custom_call.1} parent=1 // loop_exit
      _
    %784 = vsyncpa [#allocation3], 1
    %s785 = scalar_lea.sflag [#allocation3], 1
    %786 = vsyncpa %s785, 1
    %787 = vsyncpa [#allocation4], 1
    %s788 = scalar_lea.sflag [#allocation4], 1
    %789 = vsyncpa %s788, 1

</llo_original>
